<compile_context>
chip_gen: v6e
topology: v6e:2x2x1
jax: 0.10.0
libtpu: 0.0.40
codegen_flags: <defaults>
</compile_context>

<pallas_src>
import functools

import jax
import jax.numpy as jnp
from jax.experimental import pallas as pl
from jax.experimental.pallas import tpu as pltpu


def _round_up(x, m):
    return (x + m - 1) // m * m


def _pick_row_tile(n, c, itemsize):
    # ~8 MiB budget for the double-buffered logits stream: 2 * tm * c * itemsize
    budget = 8 * 1024 * 1024
    tm = budget // max(1, 2 * c * itemsize)
    tm = min(tm, 512, _round_up(n, 8))
    tm = max(8, (tm // 8) * 8)
    return int(tm)


def _ce_kernel(logits_ref, tgt_ref, out_ref, acc_ref, *, n, tm, inv_n):
    i = pl.program_id(0)

    @pl.when(i == 0)
    def _():
        acc_ref[0] = jnp.float32(0.0)

    x = logits_ref[...].astype(jnp.float32)          # (tm, C), in-kernel upcast
    t = tgt_ref[...]                                 # (tm, 1) int32

    needs_mask = (n % tm) != 0
    if needs_mask:
        # rows past the true batch size read unspecified padding; neutralize
        row = jax.lax.broadcasted_iota(jnp.int32, (tm, 1), 0) + i * tm
        valid = row < n                              # (tm, 1) bool
        x = jnp.where(valid, x, 0.0)

    # numerically-stable log-sum-exp over the class (lane) axis
    m = jnp.max(x, axis=-1, keepdims=True)                              # (tm, 1)
    lse = m + jnp.log(jnp.sum(jnp.exp(x - m), axis=-1, keepdims=True))  # (tm, 1)

    # logit at the target class via masked select + sum (VPU vsel, no gather)
    classes = jax.lax.broadcasted_iota(jnp.int32, x.shape, 1)           # (tm, C)
    picked = jnp.sum(jnp.where(classes == t, x, 0.0),
                     axis=-1, keepdims=True)                            # (tm, 1)

    per_row = lse - picked                                              # (tm, 1)
    if needs_mask:
        per_row = jnp.where(valid, per_row, 0.0)

    acc_ref[0] += jnp.sum(per_row)

    @pl.when(i == pl.num_programs(0) - 1)
    def _():
        out_ref[0] = acc_ref[0] * inv_n


def l2loss_with_multi4(output1, target1):
    """JAX/Pallas equivalent of l2lossWithMulti4.forward (mean CE loss)."""
    n, c = output1.shape
    tm = _pick_row_tile(n, c, output1.dtype.itemsize)
    grid = (pl.cdiv(n, tm),)

    # TODO(synk): torch CrossEntropyLoss's ignore_index (default -100) is not
    # handled; targets are assumed to be valid class indices in [0, C).
    tgt = target1.astype(jnp.int32).reshape(n, 1)

    kernel = functools.partial(_ce_kernel, n=n, tm=tm, inv_n=float(1.0 / n))

    out = pl.pallas_call(
        kernel,
        out_shape=jax.ShapeDtypeStruct((1,), jnp.float32),
        grid_spec=pltpu.PrefetchScalarGridSpec(
            num_scalar_prefetch=0,
            grid=grid,
            in_specs=[
                # logits stream: native dtype, tiled over rows, class axis full
                pl.BlockSpec((tm, c), lambda i: (i, 0)),
                # targets: tiny (tm, 1) int32 block per tile. Kept in VMEM
                # (not SMEM scalar-prefetch) because the vectorized one-hot
                # compare needs targets in a vreg; stream is only 4*tm B/step.
                pl.BlockSpec((tm, 1), lambda i: (i, 0)),
            ],
            out_specs=pl.BlockSpec(memory_space=pltpu.SMEM),
            scratch_shapes=[pltpu.SMEM((1,), jnp.float32)],
        ),
        compiler_params=pltpu.CompilerParams(
            # sequential grid: SMEM accumulator carries across steps
            dimension_semantics=("arbitrary",),
            vmem_limit_bytes=32 * 1024 * 1024,  # safe on v5e/v6e/v7x
        ),
    )(output1, tgt)
    return out[0]


if __name__ == "__main__":
    key = jax.random.PRNGKey(0)
    k1, k2 = jax.random.split(key)

    N, C = 8, 32  # batch of 8 samples, 32 classes
    logits = jax.random.normal(k1, (N, C), dtype=jnp.float32)
    targets = jax.random.randint(k2, (N,), 0, C, dtype=jnp.int32)

    loss = l2loss_with_multi4(logits, targets)
    jax.block_until_ready(loss)

    # reference check in plain JAX (same semantics as torch CrossEntropyLoss)
    logp = jax.nn.log_softmax(logits, axis=-1)
    ref = -jnp.mean(jnp.take_along_axis(logp, targets[:, None], axis=-1))
    assert jnp.allclose(loss, ref, atol=1e-5, rtol=1e-5), (loss, ref)

    print("KERNEL_OK")
</pallas_src>

<mosaic_0001>
module attributes {stable_mosaic.version = 11 : i64} {
  func.func @_ce_kernel(%arg0: i32, %arg1: memref<8x32xf32, #tpu.memory_space<vmem>>, %arg2: memref<8x1xi32, #tpu.memory_space<vmem>>, %arg3: memref<1xf32, #tpu.memory_space<smem>>, %arg4: memref<1xf32, #tpu.memory_space<smem>>) attributes {dimension_semantics = [#tpu.dimension_semantics<arbitrary>], iteration_bounds = array<i64: 1>, scalar_prefetch = 0 : i64, scratch_operands = 1 : i64, tpu.core_type = #tpu.core_type<tc>, window_params = [{transform_indices = @transform_0, window_bounds = array<i64: 8, 32>}, {transform_indices = @transform_1, window_bounds = array<i64: 8, 1>}, {transform_indices = @transform_2, window_bounds = array<i64: 1>}]} {
    %c0_i32 = arith.constant 0 : i32
    %0 = arith.cmpi eq, %arg0, %c0_i32 : i32
    %1 = arith.extui %0 : i1 to i32
    %c0_i32_0 = arith.constant 0 : i32
    %2 = arith.cmpi ne, %1, %c0_i32_0 : i32
    scf.if %2 {
      %cst_12 = arith.constant 0.000000e+00 : f32
      %c0_13 = arith.constant 0 : index
      %32 = memref.load %arg4[%c0_13] : memref<1xf32, #tpu.memory_space<smem>>
      memref.store %cst_12, %arg4[%c0_13] : memref<1xf32, #tpu.memory_space<smem>>
    } else {
    }
    %c0 = arith.constant 0 : index
    %c0_1 = arith.constant 0 : index
    %3 = vector.load %arg1[%c0, %c0_1] : memref<8x32xf32, #tpu.memory_space<vmem>>, vector<8x32xf32>
    %c0_2 = arith.constant 0 : index
    %c0_3 = arith.constant 0 : index
    %4 = vector.load %arg2[%c0_2, %c0_3] : memref<8x1xi32, #tpu.memory_space<vmem>>, vector<8x1xi32>
    %cst = arith.constant dense<0xFF800000> : vector<8xf32>
    %5 = vector.multi_reduction <maximumf>, %3, %cst [1] : vector<8x32xf32> to vector<8xf32>
    %6 = vector.shape_cast %5 : vector<8xf32> to vector<8x1xf32>
    %7 = vector.broadcast %6 : vector<8x1xf32> to vector<8x32xf32>
    %8 = arith.subf %3, %7 : vector<8x32xf32>
    %9 = math.exp %8 : vector<8x32xf32>
    %cst_4 = arith.constant dense<0.000000e+00> : vector<8xf32>
    %10 = vector.multi_reduction <add>, %9, %cst_4 [1] : vector<8x32xf32> to vector<8xf32>
    %11 = vector.shape_cast %10 : vector<8xf32> to vector<8x1xf32>
    %12 = math.log %11 : vector<8x1xf32>
    %13 = arith.addf %6, %12 : vector<8x1xf32>
    %14 = tpu.iota {dimensions = array<i32: 1>} : vector<8x32xi32>
    %15 = vector.broadcast %4 : vector<8x1xi32> to vector<8x32xi32>
    %16 = arith.cmpi eq, %14, %15 : vector<8x32xi32>
    %cst_5 = arith.constant 0.000000e+00 : f32
    %17 = vector.broadcast %cst_5 : f32 to vector<8x32xf32>
    %18 = arith.select %16, %3, %17 : vector<8x32xi1>, vector<8x32xf32>
    %cst_6 = arith.constant dense<0.000000e+00> : vector<8xf32>
    %19 = vector.multi_reduction <add>, %18, %cst_6 [1] : vector<8x32xf32> to vector<8xf32>
    %20 = vector.shape_cast %19 : vector<8xf32> to vector<8x1xf32>
    %21 = arith.subf %13, %20 : vector<8x1xf32>
    %c0_7 = arith.constant 0 : index
    %22 = memref.load %arg4[%c0_7] : memref<1xf32, #tpu.memory_space<smem>>
    %23 = vector.shape_cast %21 : vector<8x1xf32> to vector<1x8x1xf32>
    %cst_8 = arith.constant dense<0.000000e+00> : vector<1xf32>
    %24 = vector.multi_reduction <add>, %23, %cst_8 [1, 2] : vector<1x8x1xf32> to vector<1xf32>
    %25 = vector.shape_cast %24 : vector<1xf32> to vector<1x1x1xf32>
    %26 = vector.extract %25[0, 0, 0] : f32 from vector<1x1x1xf32>
    %27 = arith.addf %22, %26 : f32
    %c0_9 = arith.constant 0 : index
    %28 = memref.load %arg4[%c0_9] : memref<1xf32, #tpu.memory_space<smem>>
    memref.store %27, %arg4[%c0_9] : memref<1xf32, #tpu.memory_space<smem>>
    %c0_i32_10 = arith.constant 0 : i32
    %29 = arith.cmpi eq, %arg0, %c0_i32_10 : i32
    %30 = arith.extui %29 : i1 to i32
    %c0_i32_11 = arith.constant 0 : i32
    %31 = arith.cmpi ne, %30, %c0_i32_11 : i32
    scf.if %31 {
      %c0_12 = arith.constant 0 : index
      %32 = memref.load %arg4[%c0_12] : memref<1xf32, #tpu.memory_space<smem>>
      %cst_13 = arith.constant 1.250000e-01 : f32
      %33 = arith.mulf %32, %cst_13 : f32
      %c0_14 = arith.constant 0 : index
      %34 = memref.load %arg3[%c0_14] : memref<1xf32, #tpu.memory_space<smem>>
      memref.store %33, %arg3[%c0_14] : memref<1xf32, #tpu.memory_space<smem>>
    } else {
    }
    return
  }
  func.func @transform_0(%arg0: i32) -> (i32, i32) {
    %c0_i32 = arith.constant 0 : i32
    %c0_i32_0 = arith.constant 0 : i32
    return %arg0, %c0_i32 : i32, i32
  }
  func.func @transform_1(%arg0: i32) -> (i32, i32) {
    %c0_i32 = arith.constant 0 : i32
    %c0_i32_0 = arith.constant 0 : i32
    return %arg0, %c0_i32 : i32, i32
  }
  func.func @transform_2(%arg0: i32) -> i32 {
    %c0_i32 = arith.constant 0 : i32
    %c0_i32_0 = arith.constant 0 : i32
    return %c0_i32 : i32
  }
}

</mosaic_0001>

<llo_original>
// kernel: tpu_custom_call.1
$region0: #{tpu_custom_call.1}
  #allocation0 [shape = 'u32[]', space=smem, size = 0x4, offset = 0x4, fixed_abs, tag = 'smem constant byte address 0x4 - core index']
  #allocation1 [shape = 'u32[144,128]{1,0:T(1,128)}', space=vmem, size = 0x12000, scoped, tag = 'internal scratch']
  #allocation2 [shape = 'f32[1]{0:T(128)}', space=smem, size = 0x200, scoped, tag = 'scratch operand']
  %s0 = inlined_call_operand.vmem [shape: f32[8,32], index: 0, kind: input, shape index: {}]
  %s1 = inlined_call_operand.vmem [shape: s32[8,1], index: 1, kind: input, shape index: {}]
  %s2 = inlined_call_operand.hbm [shape: f32[1], index: 2, kind: output, shape index: {}]
  %s3 = sld [smem:[#allocation0]]
  $region26: #{tpu_custom_call.1} parent=0
    _
  %s5 = ssub.s32 1, %s3
  %s6 = scalar_select 0, %s5, %s3
  $region1: #{tpu_custom_call.1} parent=0
    #allocation3 [shape = 'u8[512]{0}', space=smem, size = 0x200, scoped, tag = 'output window, operand 0, single buffered']
    #allocation4 [shape = 's32[1]{0}', space=sflag, size = 0x4, scoped, tag = 'scoped memory for tpu_custom_call.1']
    %7 = vsyncpa [#allocation4], 0
    // Predicated region
    $region2: #{tpu_custom_call.1} parent=1 // pred_check
      _
    $region3: #{tpu_custom_call.1} parent=1 // pred_check_branch
      %9 = sbr.rel (0) target = $region5
    $region4: #{tpu_custom_call.1} parent=1 // pred_region
      _
    $region5: #{tpu_custom_call.1} parent=1 // pred_fallthru
      _
    // Predicated region
    $region6: #{tpu_custom_call.1} parent=1 // pred_check
      _
    $region7: #{tpu_custom_call.1} parent=1 // pred_check_branch
      %11 = sbr.rel (0) target = $region9
    $region8: #{tpu_custom_call.1} parent=1 // pred_region
      _
    $region9: #{tpu_custom_call.1} parent=1 // pred_fallthru
      _
    %p12 = scmp.eq.s32.totalorder 0, 0
    // Predicated region
    $region10: #{tpu_custom_call.1} parent=1 // pred_check
      %p13 = pneg %p12
    $region11: #{tpu_custom_call.1} parent=1 // pred_check_branch
      %15 = sbr.rel (%p13) target = $region13
    $region12: #{tpu_custom_call.1} parent=1 // pred_region
      %s16 = scalar_lea.smem [#allocation2], 0
      %17 = sst [smem:[%s16]] 0.0
    $region13: #{tpu_custom_call.1} parent=1 // pred_fallthru
      _
    %v18 = vld [vmem:[%s0] sm:$0xff]
    %v19 = vld [vmem:[%s1] sm:$0xff]
    %vm20 = vcmask 261120
    %v21 = vsel %vm20, %v18, -inf
    %22 = vmax.xlane.f32.xlu0 %v21
    %v23 = vpop.xlane.xlu0 %22
    %v24 = vsub.f32 %v18, %v23
    %v25 = vmul.f32 %v24, 1.442695
    %v26 = vpow.pop %v25
    %v27 = vsel %vm20, %v26, 0.0
    %28 = vadd.xlane.f32.xlu0 %v27
    %v29 = vpop.xlane.xlu0 %28
    %v30 = vlog2.pop %v29
    %v31 = vmul.f32 %v30, 0.6931472
    %v32 = vadd.f32 %v23, %v31
    %v33 = vlaneseq
    %v34 = vand.u32 %v33, 127
    %35 = vset.pattern.permute.xlu0 0
    %36 = vperm.xlu0 %35, %v19
    %v37 = vpop.permute.xlu0 %36
    %vm38 = vcmp.eq.s32.totalorder %v34, %v37
    %v39 = vsel %vm38, %v18, 0.0
    %v40 = vsel %vm20, %v39, 0.0
    %41 = vadd.xlane.f32.xlu0 %v40
    %v42 = vpop.xlane.xlu0 %41
    %v43 = vsub.f32 %v32, %v42
    %s44 = sld [smem:[#allocation2]]
    %vm45 = vcmask 7168
    %v46 = vsel %vm45, %v43, 0.0
    %47 = vadd.xlane.f32.xlu0 %v46
    %v48 = vpop.xlane.xlu0 %47
    %v49 = vrot.slane %v48, 4
    %v50 = vadd.f32 %v48, %v49
    %v51 = vrot.slane %v50, 2
    %v52 = vadd.f32 %v50, %v51
    %v53 = vrot.slane %v52, 1
    %v54 = vadd.f32 %v52, %v53
    %s55 = vtos %v54
    %s56 = sadd.f32 %s44, %s55
    %s57 = scalar_lea.smem [#allocation2], 0
    %58 = sst [smem:[%s57]] %s56
    // Predicated region
    $region14: #{tpu_custom_call.1} parent=1 // pred_check
      %p59 = pneg %p12
    $region15: #{tpu_custom_call.1} parent=1 // pred_check_branch
      %61 = sbr.rel (%p59) target = $region17
    $region16: #{tpu_custom_call.1} parent=1 // pred_region
      %s62 = sld [smem:[#allocation2]]
      %s63 = smul.f32 %s62, 0.125
      %s64 = scalar_lea.smem [#allocation3], 0
      %65 = sst [smem:[%s64]] %s63
    $region17: #{tpu_custom_call.1} parent=1 // pred_fallthru
      _
    // Predicated region
    $region18: #{tpu_custom_call.1} parent=1 // pred_check
      _
    $region19: #{tpu_custom_call.1} parent=1 // pred_check_branch
      %67 = sbr.rel (0) target = $region21
    $region20: #{tpu_custom_call.1} parent=1 // pred_region
      %s69 = ssub.s32 16, 16
      %70 = vsyncadd [#allocation4], %s69
      %73 = dma.smem_to_hbm [#allocation3], 16, %s2, [#allocation4]
    $region21: #{tpu_custom_call.1} parent=1 // pred_fallthru
      _
    // Predicated region
    $region22: #{tpu_custom_call.1} parent=1 // pred_check
      _
    $region23: #{tpu_custom_call.1} parent=1 // pred_check_branch
      %75 = sbr.rel (0) target = $region25
    $region24: #{tpu_custom_call.1} parent=1 // pred_region
      %76 = dma.done [#allocation4], 16
    $region25: #{tpu_custom_call.1} parent=1 // pred_fallthru
      _
    %77 = sfence
    %78 = vsyncpa [#allocation4], 1

</llo_original>
